<compile_context>
chip_gen: v7x
topology: tpu7x:2x2x1
jax: 0.10.0
libtpu: 0.0.40
codegen_flags: <defaults>
</compile_context>

<pallas_src>
import functools

import jax
import jax.numpy as jnp
from jax import lax
from jax.experimental import pallas as pl
from jax.experimental.pallas import tpu as pltpu

BN_EPS = 1e-5
MAX_TILE_HW = 2048                  # lane-axis tile cap (multiple of 128)
VMEM_BUDGET = 20 * 1024 * 1024      # per-step working-set target (v7x-safe)
VMEM_LIMIT = 48 * 1024 * 1024       # scoped VMEM limit (< v7x 64 MiB physical)


# ----------------------------------------------------------------------------
# Kernels
# ----------------------------------------------------------------------------
def _tile_stats(h, sum_ref, m2_ref, *, tile_hw, hw, masked):
    """Per-(batch, hw-tile) partial BN stats of h (C, tile_hw):

    writes the per-tile column sum and the per-tile-mean-centered M2.
    Centering at the tile mean avoids E[x^2]-E[x]^2 cancellation; partials are
    merged with Chan's formula in the wrapper.  Cross-lane sums ride the XLU,
    which has slack while HBM / MXU bind.
    """
    if masked:
        col = (pl.program_id(1) * tile_hw
               + lax.broadcasted_iota(jnp.int32, (1, tile_hw), 1))
        valid = col < hw
        cnt = jnp.minimum(tile_hw, hw - pl.program_id(1) * tile_hw)
        cnt = cnt.astype(jnp.float32)
        hm = jnp.where(valid, h, 0.0)
    else:
        valid = None
        cnt = jnp.float32(tile_hw)
        hm = h

    s = jnp.sum(hm, axis=1, keepdims=True)                 # (C, 1)
    mu = s / cnt
    d = (h - mu) if valid is None else jnp.where(valid, h - mu, 0.0)
    sum_ref[...] = s
    m2_ref[...] = jnp.sum(d * d, axis=1, keepdims=True)


def conv1_stats_kernel(x_ref, w1_ref, b1_ref, h1_ref, sum_ref, m2_ref,
                       *, tile_hw, hw, masked):
    """Phase 1: h1 = W1 @ x + b1 (1x1 conv == per-column matmul), stored bf16,
    plus bn1 partial stats of the bf16-rounded h1."""
    h = jnp.dot(w1_ref[...], x_ref[...].astype(jnp.bfloat16),
                preferred_element_type=jnp.float32) + b1_ref[...]
    hb = h.astype(jnp.bfloat16)
    h1_ref[...] = hb                                       # bf16 halves h1 traffic
    _tile_stats(hb.astype(jnp.float32), sum_ref, m2_ref,
                tile_hw=tile_hw, hw=hw, masked=masked)


def conv2_stats_kernel(h1_ref, w2_ref, b2_ref, sc1_ref, sh1_ref,
                       sum_ref, m2_ref, *, tile_hw, hw, masked):
    """Phase 2: bn2 partial stats of h2 = W2 @ relu(bn1(h1)) + b2.
    h2 never touches HBM -- phase 3 recomputes it."""
    t = jnp.maximum(h1_ref[...].astype(jnp.float32) * sc1_ref[...] + sh1_ref[...],
                    0.0)
    h = jnp.dot(w2_ref[...], t.astype(jnp.bfloat16),
                preferred_element_type=jnp.float32) + b2_ref[...]
    _tile_stats(h, sum_ref, m2_ref, tile_hw=tile_hw, hw=hw, masked=masked)


def finalize_kernel(h1_ref, x_ref, w2_ref, b2_ref, sc1_ref, sh1_ref,
                    sc2_ref, sh2_ref, out_ref):
    """Phase 3: recompute h2 = W2 @ relu(bn1(h1)) + b2 (identical math to
    phase 2), then out = relu(bn2(h2) + x) (identity shortcut)."""
    t = jnp.maximum(h1_ref[...].astype(jnp.float32) * sc1_ref[...] + sh1_ref[...],
                    0.0)
    h2 = jnp.dot(w2_ref[...], t.astype(jnp.bfloat16),
                 preferred_element_type=jnp.float32) + b2_ref[...]
    out_ref[...] = jnp.maximum(h2 * sc2_ref[...] + sh2_ref[...] + x_ref[...], 0.0)


# ----------------------------------------------------------------------------
# Wrapper
# ----------------------------------------------------------------------------
def _pick_tile_hw(c, hw):
    """Largest multiple-of-128 hw tile (<= 2048) whose double-buffered
    bf16-h1 + f32-x + f32-out working set fits the per-step VMEM budget."""
    per_col = 2 * (2 + 4 + 4) * c          # 2x for double buffering
    cap = max(128, min(MAX_TILE_HW, (VMEM_BUDGET // per_col) // 128 * 128))
    return hw if hw <= cap else cap


def _bn_affine_from_partials(sum_p, m2_p, cnt, gamma, beta, m_total):
    """Merge per-(batch, tile) (count, sum, centered-M2) partials via Chan's
    formula and fold training-mode BN into a per-channel affine y = h*s + t."""
    mean = jnp.sum(sum_p, axis=(0, 1)) / m_total                     # (C, 1)
    tile_mean = sum_p / cnt                                          # (N, T, C, 1)
    m2 = jnp.sum(m2_p + cnt * (tile_mean - mean) ** 2, axis=(0, 1))  # (C, 1)
    var = jnp.maximum(m2 / m_total, 0.0)
    scale = gamma * lax.rsqrt(var + BN_EPS)
    shift = beta - mean * scale
    return scale, shift


def basic_block_pallas(x_nchw, params, *, tile_hw=None):
    """x_nchw: (N, C, H, W) float32.  params: see make_params."""
    N, C, H, W = x_nchw.shape
    c_out, c_in = params["w1"].shape
    assert c_in == C and c_out == C, "identity shortcut requires Cin == Cout"

    HW = H * W
    M = N * HW
    if tile_hw is None:
        tile_hw = _pick_tile_hw(C, HW)
    assert tile_hw == HW or tile_hw % 128 == 0, "hw tile must be 128-aligned"
    T = pl.cdiv(HW, tile_hw)
    masked = (HW % tile_hw) != 0
    grid = (N, T)

    # NCHW -> (N, C, HW) is a free reshape; the lane-dense (C, tile_hw) blocks
    # are produced directly by the BlockSpec DMAs (no transpose / pad passes).
    xm = x_nchw.reshape(N, C, HW).astype(jnp.float32)

    w1 = params["w1"].astype(jnp.bfloat16)
    w2 = params["w2"].astype(jnp.bfloat16)
    b1 = params["b1"].reshape(C, 1).astype(jnp.float32)
    b2 = params["b2"].reshape(C, 1).astype(jnp.float32)
    g1 = params["g1"].reshape(C, 1).astype(jnp.float32)
    be1 = params["be1"].reshape(C, 1).astype(jnp.float32)
    g2 = params["g2"].reshape(C, 1).astype(jnp.float32)
    be2 = params["be2"].reshape(C, 1).astype(jnp.float32)

    f32 = jnp.float32
    x_spec = pl.BlockSpec((pl.Squeezed(), C, tile_hw), lambda n, t: (n, 0, t))
    w_spec = pl.BlockSpec((C, C), lambda n, t: (0, 0))
    chan_spec = pl.BlockSpec((C, 1), lambda n, t: (0, 0))
    stat_spec = pl.BlockSpec((pl.Squeezed(), pl.Squeezed(), C, 1),
                             lambda n, t: (n, t, 0, 0))
    stat_shape = jax.ShapeDtypeStruct((N, T, C, 1), f32)

    # Per-(n, tile) stat partials => no cross-iteration accumulator, so both
    # grid axes are "parallel" and v7x megacore can use both TensorCores.
    cparams = pltpu.CompilerParams(
        dimension_semantics=("parallel", "parallel"),
        vmem_limit_bytes=VMEM_LIMIT)

    conv_flops = 2 * C * C * M + C * M
    small_bytes = 2 * C * C * 2 + 8 * C * 4 + 4 * N * T * C * 4

    # --- phase 1: conv1 (bf16 h1 to HBM) + bn1 partial stats ----------------
    h1, s1, m21 = pl.pallas_call(
        functools.partial(conv1_stats_kernel,
                          tile_hw=tile_hw, hw=HW, masked=masked),
        grid=grid,
        in_specs=[x_spec, w_spec, chan_spec],
        out_specs=[x_spec, stat_spec, stat_spec],
        out_shape=[jax.ShapeDtypeStruct((N, C, HW), jnp.bfloat16),
                   stat_shape, stat_shape],
        compiler_params=cparams,
        cost_estimate=pl.CostEstimate(flops=conv_flops, transcendentals=0,
                                      bytes_accessed=6 * C * M + small_bytes),
    )(xm, w1, b1)

    # Valid-column count per hw tile (only the last tile can be short).
    cnt = jnp.minimum(tile_hw, HW - jnp.arange(T) * tile_hw).astype(f32)
    cnt = cnt.reshape(1, T, 1, 1)
    scale1, shift1 = _bn_affine_from_partials(s1, m21, cnt, g1, be1, M)

    # --- phase 2: bn2 partial stats of conv2(relu(bn1(h1))) -----------------
    # (h2 is not written to HBM; phase 3 recomputes it -- MXU has slack.)
    s2, m22 = pl.pallas_call(
        functools.partial(conv2_stats_kernel,
                          tile_hw=tile_hw, hw=HW, masked=masked),
        grid=grid,
        in_specs=[x_spec, w_spec, chan_spec, chan_spec, chan_spec],
        out_specs=[stat_spec, stat_spec],
        out_shape=[stat_shape, stat_shape],
        compiler_params=cparams,
        cost_estimate=pl.CostEstimate(flops=conv_flops + 3 * C * M,
                                      transcendentals=0,
                                      bytes_accessed=2 * C * M + small_bytes),
    )(h1, w2, b2, scale1, shift1)

    scale2, shift2 = _bn_affine_from_partials(s2, m22, cnt, g2, be2, M)

    # --- phase 3: recompute conv2, bn2 + residual + relu, write (N,C,HW) ----
    out = pl.pallas_call(
        finalize_kernel,
        grid=grid,
        in_specs=[x_spec, x_spec, w_spec, chan_spec, chan_spec, chan_spec,
                  chan_spec, chan_spec],
        out_specs=x_spec,
        out_shape=jax.ShapeDtypeStruct((N, C, HW), f32),
        compiler_params=cparams,
        cost_estimate=pl.CostEstimate(flops=conv_flops + 6 * C * M,
                                      transcendentals=0,
                                      bytes_accessed=10 * C * M + small_bytes),
    )(h1, xm, w2, b2, scale1, shift1, scale2, shift2)

    return out.reshape(N, C, H, W)


# ----------------------------------------------------------------------------
# Params + pure-JAX reference
# ----------------------------------------------------------------------------
def make_params(key, in_channel, out_channel):
    """Synthetic parameters matching BasicBlock shapes.
    Conv weights stored as (Cout, Cin) (PyTorch (Cout, Cin, 1, 1) squeezed)."""
    k1, k2, k3, k4 = jax.random.split(key, 4)
    s1 = 1.0 / jnp.sqrt(in_channel)
    s2 = 1.0 / jnp.sqrt(out_channel)
    w1 = jax.random.normal(k1, (out_channel, in_channel), jnp.float32) * s1
    b1 = jax.random.normal(k2, (out_channel,), jnp.float32) * s1
    w2 = jax.random.normal(k3, (out_channel, out_channel), jnp.float32) * s2
    b2 = jax.random.normal(k4, (out_channel,), jnp.float32) * s2
    g1 = jnp.ones((out_channel,), jnp.float32)
    be1 = jnp.zeros((out_channel,), jnp.float32)
    g2 = jnp.ones((out_channel,), jnp.float32)
    be2 = jnp.zeros((out_channel,), jnp.float32)
    return dict(w1=w1, b1=b1, g1=g1, be1=be1, w2=w2, b2=b2, g2=g2, be2=be2)


def basic_block_reference(x_nchw, params):
    """Pure-JAX mirror of the kernel numerics: bf16 matmul operands, bf16-stored
    h1 intermediate, f32 accumulation, training-mode (batch-stats) BatchNorm."""
    N, C, H, W = x_nchw.shape
    M = N * H * W
    xm = x_nchw.reshape(N, C, H * W).transpose(1, 0, 2).reshape(C, M)
    xm = xm.astype(jnp.float32)

    def bn(h, g, b):
        mean = jnp.mean(h, axis=1, keepdims=True)
        var = jnp.mean((h - mean) ** 2, axis=1, keepdims=True)
        return (h - mean) * lax.rsqrt(var + BN_EPS) * g[:, None] + b[:, None]

    h1 = jnp.dot(params["w1"].astype(jnp.bfloat16), xm.astype(jnp.bfloat16),
                 preferred_element_type=jnp.float32) + params["b1"][:, None]
    h1 = h1.astype(jnp.bfloat16).astype(jnp.float32)   # h1 is stored bf16 by the kernel
    t = jnp.maximum(bn(h1, params["g1"], params["be1"]), 0.0)
    h2 = jnp.dot(params["w2"].astype(jnp.bfloat16), t.astype(jnp.bfloat16),
                 preferred_element_type=jnp.float32) + params["b2"][:, None]
    out = jnp.maximum(bn(h2, params["g2"], params["be2"]) + xm, 0.0)
    return out.reshape(C, N, H, W).transpose(1, 0, 2, 3)


if __name__ == "__main__":
    key = jax.random.PRNGKey(0)
    kx, kp, kx2 = jax.random.split(key, 3)

    # Identity shortcut => in_channel == out_channel.
    N, C, H, W = 2, 16, 16, 16
    params = make_params(kp, in_channel=C, out_channel=C)
    x = jax.random.normal(kx, (N, C, H, W), jnp.float32)       # NCHW, like PyTorch

    out = jax.block_until_ready(basic_block_pallas(x, params))
    ref = basic_block_reference(x, params)
    assert out.shape == (N, C, H, W)
    err = float(jnp.max(jnp.abs(out - ref)))
    assert jnp.allclose(out, ref, atol=2e-3, rtol=2e-3), f"mismatch: {err:.3e}"

    # Ragged last tile (HW % tile_hw != 0) exercises the masked-stats path.
    H2, W2 = 16, 24
    x2 = jax.random.normal(kx2, (N, C, H2, W2), jnp.float32)
    out2 = jax.block_until_ready(basic_block_pallas(x2, params, tile_hw=256))
    ref2 = basic_block_reference(x2, params)
    err2 = float(jnp.max(jnp.abs(out2 - ref2)))
    assert jnp.allclose(out2, ref2, atol=2e-3, rtol=2e-3), \
        f"masked-tile mismatch: {err2:.3e}"

    print("KERNEL_OK")
</pallas_src>

<mosaic_0001>
module attributes {stable_mosaic.version = 11 : i64} {
  func.func @conv1_stats_kernel(%arg0: i32, %arg1: i32, %arg2: memref<1x16x256xf32, #tpu.memory_space<vmem>>, %arg3: memref<16x16xbf16, #tpu.memory_space<vmem>>, %arg4: memref<16x1xf32, #tpu.memory_space<vmem>>, %arg5: memref<1x16x256xbf16, #tpu.memory_space<vmem>>, %arg6: memref<1x1x16x1xf32, #tpu.memory_space<vmem>>, %arg7: memref<1x1x16x1xf32, #tpu.memory_space<vmem>>) attributes {dimension_semantics = [#tpu.dimension_semantics<parallel>, #tpu.dimension_semantics<parallel>], iteration_bounds = array<i64: 2, 1>, scalar_prefetch = 0 : i64, scratch_operands = 0 : i64, tpu.core_type = #tpu.core_type<tc>, window_params = [{transform_indices = @transform_0, window_bounds = array<i64: 1, 16, 256>}, {pipeline_mode = #tpu.pipeline_mode<synchronous>, transform_indices = @transform_1, window_bounds = array<i64: 16, 16>}, {pipeline_mode = #tpu.pipeline_mode<synchronous>, transform_indices = @transform_2, window_bounds = array<i64: 16, 1>}, {transform_indices = @transform_3, window_bounds = array<i64: 1, 16, 256>}, {transform_indices = @transform_4, window_bounds = array<i64: 1, 1, 16, 1>}, {transform_indices = @transform_5, window_bounds = array<i64: 1, 1, 16, 1>}]} {
    %c0 = arith.constant 0 : index
    %c0_0 = arith.constant 0 : index
    %0 = vector.load %arg3[%c0, %c0_0] : memref<16x16xbf16, #tpu.memory_space<vmem>>, vector<16x16xbf16>
    %c0_1 = arith.constant 0 : index
    %c0_2 = arith.constant 0 : index
    %c0_3 = arith.constant 0 : index
    %1 = vector.load %arg2[%c0_1, %c0_2, %c0_3] : memref<1x16x256xf32, #tpu.memory_space<vmem>>, vector<1x16x256xf32>
    %2 = vector.shape_cast %1 : vector<1x16x256xf32> to vector<16x256xf32>
    %3 = arith.truncf %2 : vector<16x256xf32> to vector<16x256xbf16>
    %cst = arith.constant dense<0.000000e+00> : vector<16x256xf32>
    %4 = tpu.matmul %0, %3, %cst {dimension_numbers = #tpu.dot_dimension_numbers<[1], [0], [0], [1], [0, 0, 1, 1], [], []>} : vector<16x16xbf16>, vector<16x256xbf16>, vector<16x256xf32> -> vector<16x256xf32>
    %c0_4 = arith.constant 0 : index
    %c0_5 = arith.constant 0 : index
    %5 = vector.load %arg4[%c0_4, %c0_5] : memref<16x1xf32, #tpu.memory_space<vmem>>, vector<16x1xf32>
    %6 = vector.broadcast %5 : vector<16x1xf32> to vector<16x256xf32>
    %7 = arith.addf %4, %6 : vector<16x256xf32>
    %8 = arith.truncf %7 : vector<16x256xf32> to vector<16x256xbf16>
    %c0_6 = arith.constant 0 : index
    %c0_7 = arith.constant 0 : index
    %c0_8 = arith.constant 0 : index
    %9 = vector.load %arg5[%c0_6, %c0_7, %c0_8] : memref<1x16x256xbf16, #tpu.memory_space<vmem>>, vector<1x16x256xbf16>
    %10 = vector.shape_cast %9 : vector<1x16x256xbf16> to vector<16x256xbf16>
    %11 = vector.shape_cast %8 : vector<16x256xbf16> to vector<1x16x256xbf16>
    tpu.vector_store %arg5[%c0_6, %c0_7, %c0_8], %11 {strides = array<i32>} : memref<1x16x256xbf16, #tpu.memory_space<vmem>>, vector<1x16x256xbf16>,
    %12 = arith.extf %8 : vector<16x256xbf16> to vector<16x256xf32>
    %cst_9 = arith.constant dense<0.000000e+00> : vector<16xf32>
    %13 = vector.multi_reduction <add>, %12, %cst_9 [1] : vector<16x256xf32> to vector<16xf32>
    %14 = vector.shape_cast %13 : vector<16xf32> to vector<16x1xf32>
    %cst_10 = arith.constant 2.560000e+02 : f32
    %15 = vector.broadcast %cst_10 : f32 to vector<16x1xf32>
    %16 = arith.divf %14, %15 : vector<16x1xf32>
    %17 = vector.broadcast %16 : vector<16x1xf32> to vector<16x256xf32>
    %18 = arith.subf %12, %17 : vector<16x256xf32>
    %c0_11 = arith.constant 0 : index
    %c0_12 = arith.constant 0 : index
    %c0_13 = arith.constant 0 : index
    %c0_14 = arith.constant 0 : index
    %19 = vector.load %arg6[%c0_11, %c0_12, %c0_13, %c0_14] : memref<1x1x16x1xf32, #tpu.memory_space<vmem>>, vector<1x1x16x1xf32>
    %20 = vector.shape_cast %19 : vector<1x1x16x1xf32> to vector<16x1xf32>
    %21 = vector.shape_cast %14 : vector<16x1xf32> to vector<1x1x16x1xf32>
    tpu.vector_store %arg6[%c0_11, %c0_12, %c0_13, %c0_14], %21 {strides = array<i32>} : memref<1x1x16x1xf32, #tpu.memory_space<vmem>>, vector<1x1x16x1xf32>,
    %22 = arith.mulf %18, %18 : vector<16x256xf32>
    %cst_15 = arith.constant dense<0.000000e+00> : vector<16xf32>
    %23 = vector.multi_reduction <add>, %22, %cst_15 [1] : vector<16x256xf32> to vector<16xf32>
    %24 = vector.shape_cast %23 : vector<16xf32> to vector<16x1xf32>
    %c0_16 = arith.constant 0 : index
    %c0_17 = arith.constant 0 : index
    %c0_18 = arith.constant 0 : index
    %c0_19 = arith.constant 0 : index
    %25 = vector.load %arg7[%c0_16, %c0_17, %c0_18, %c0_19] : memref<1x1x16x1xf32, #tpu.memory_space<vmem>>, vector<1x1x16x1xf32>
    %26 = vector.shape_cast %25 : vector<1x1x16x1xf32> to vector<16x1xf32>
    %27 = vector.shape_cast %24 : vector<16x1xf32> to vector<1x1x16x1xf32>
    tpu.vector_store %arg7[%c0_16, %c0_17, %c0_18, %c0_19], %27 {strides = array<i32>} : memref<1x1x16x1xf32, #tpu.memory_space<vmem>>, vector<1x1x16x1xf32>,
    return
  }
  func.func @transform_0(%arg0: i32, %arg1: i32) -> (i32, i32, i32) {
    %c0_i32 = arith.constant 0 : i32
    %c0_i32_0 = arith.constant 0 : i32
    return %arg0, %c0_i32, %arg1 : i32, i32, i32
  }
  func.func @transform_1(%arg0: i32, %arg1: i32) -> (i32, i32) {
    %c0_i32 = arith.constant 0 : i32
    %c0_i32_0 = arith.constant 0 : i32
    %c0_i32_1 = arith.constant 0 : i32
    return %c0_i32, %c0_i32_0 : i32, i32
  }
  func.func @transform_2(%arg0: i32, %arg1: i32) -> (i32, i32) {
    %c0_i32 = arith.constant 0 : i32
    %c0_i32_0 = arith.constant 0 : i32
    %c0_i32_1 = arith.constant 0 : i32
    return %c0_i32, %c0_i32_0 : i32, i32
  }
  func.func @transform_3(%arg0: i32, %arg1: i32) -> (i32, i32, i32) {
    %c0_i32 = arith.constant 0 : i32
    %c0_i32_0 = arith.constant 0 : i32
    return %arg0, %c0_i32, %arg1 : i32, i32, i32
  }
  func.func @transform_4(%arg0: i32, %arg1: i32) -> (i32, i32, i32, i32) {
    %c0_i32 = arith.constant 0 : i32
    %c0_i32_0 = arith.constant 0 : i32
    %c0_i32_1 = arith.constant 0 : i32
    return %arg0, %arg1, %c0_i32, %c0_i32_0 : i32, i32, i32, i32
  }
  func.func @transform_5(%arg0: i32, %arg1: i32) -> (i32, i32, i32, i32) {
    %c0_i32 = arith.constant 0 : i32
    %c0_i32_0 = arith.constant 0 : i32
    %c0_i32_1 = arith.constant 0 : i32
    return %arg0, %arg1, %c0_i32, %c0_i32_0 : i32, i32, i32, i32
  }
}

</mosaic_0001>

<llo_original>
// kernel: tpu_custom_call.1
$region0: #{tpu_custom_call.1}
  #allocation0 [shape = 'u32[]', space=smem, size = 0x4, offset = 0x4, fixed_abs, tag = 'smem constant byte address 0x4 - core index']
  #allocation1 [shape = 'u32[144,128]{1,0:T(1,128)}', space=vmem, size = 0x12000, scoped, tag = 'internal scratch']
  %s0 = inlined_call_operand.hbm [shape: f32[2,16,256], index: 0, kind: input, shape index: {}]
  %s1 = inlined_call_operand.vmem [shape: bf16[16,16], index: 1, kind: input, shape index: {}]
  %s2 = inlined_call_operand.vmem [shape: f32[16,1], index: 2, kind: input, shape index: {}]
  %s3 = inlined_call_operand.hbm [shape: bf16[2,16,256], index: 3, kind: output, shape index: {0}]
  %s4 = inlined_call_operand.vmem [shape: f32[2,1,16,1], index: 4, kind: output, shape index: {1}]
  %s5 = inlined_call_operand.vmem [shape: f32[2,1,16,1], index: 5, kind: output, shape index: {2}]
  %6 = xla_tuple %s3, %s4, %s5
  %s7 = sld [smem:[#allocation0]]
  $region65: #{tpu_custom_call.1} parent=0
    _
  %s9 = ssub.s32 1, %s7
  %s10 = scalar_select 0, %s9, %s7
  $region1: #{tpu_custom_call.1} parent=0
    #allocation2 [shape = 'u8[32768]{0}', space=vmem, size = 0x8000, scoped, tag = 'input window, operand 0']
    #allocation3 [shape = 's32[2]{0}', space=sflag, size = 0x8, scoped, tag = 'scoped memory for tpu_custom_call.1']
    #allocation4 [shape = 's32[2]{0}', space=sflag, size = 0x8, scoped, tag = 'scoped memory for tpu_custom_call.1']
    #allocation5 [shape = 'u8[16384]{0}', space=vmem, size = 0x4000, scoped, tag = 'output window, operand 0']
    %11 = vsyncpa [#allocation3], 0
    %s12 = scalar_lea.sflag [#allocation3], 1
    %13 = vsyncpa %s12, 0
    %14 = vsyncpa [#allocation4], 0
    %s15 = scalar_lea.sflag [#allocation4], 1
    %16 = vsyncpa %s15, 0
    loop: start=0, step=1, limit=4
    $region2: #{tpu_custom_call.1} parent=1 // loop_pre_header
      _
    $region3: #{tpu_custom_call.1} parent=1 // loop_header
      %s18 = sphi 0, %s22
      %p19 = scmp.ge.s32.totalorder %s18, 4
      %s25 = sphi 0, %s37
      %s26 = sphi 0, %s33
      %s27 = sphi 0, %s25
      %s28 = sphi 0, %s26
      %s29 = sphi 0, %s27
      %s30 = sphi 0, %s28
      %s42 = sphi 0, %s44
      %s45 = sphi 0, %s42
      %s46 = sphi 0, %s45
      %s62 = sphi 0, %s46
      %s66 = sphi 0, %s66
      %s68 = sphi 0, %s66
      %s69 = sphi 0, %s68
      %s83 = sphi 0, %s69
      %s87 = sphi 0, %s87
      %s89 = sphi 0, %s87
      %s90 = sphi 0, %s89
      %s104 = sphi 0, %s90
      %s112 = sphi 0, %s114
      %s115 = sphi 0, %s112
      %s116 = sphi 0, %s115
      %s132 = sphi 0, %s116
      %s140 = sphi 0, %s142
      %s143 = sphi 0, %s140
      %s144 = sphi 0, %s143
      %s160 = sphi 0, %s144
      %s168 = sphi 0, %s170
      %s171 = sphi 0, %s168
      %s172 = sphi 0, %s171
      %s188 = sphi 0, %s172
    $region4: #{tpu_custom_call.1} parent=1 // loop_header_branch
      %21 = sbr.rel (%p19) target = $region8
    $region5: #{tpu_custom_call.1} parent=1 // loop_body
      %s23 = ssub.s32 %s18, 1
      %s24 = ssub.s32 %s18, 2
      %s31 = sadd.s32 1, %s26
      %p32 = scmp.ge.s32.totalorder %s31, 1
      %s33 = scalar_select %p32, 0, %s31
      %s34 = sadd.s32 1, %s25
      %s35 = scalar_select %p32, %s34, %s25
      %p36 = scmp.ge.s32.totalorder %s35, 2
      %s37 = scalar_select %p36, 0, %s35
      %s38 = ssub.s32 %s25, %s37
      %s39 = ssub.s32 %s26, %s33
      %s40 = sor.u32 %s38, %s39
      %p41 = scmp.eq.s32.totalorder %s40, 0
      %s43 = sadd.s32 %s42, 1
      %s44 = scalar_select %p41, %s42, %s43
      %p47 = pneg %p41
      %p48 = scmp.eq.s32.totalorder %s18, 1
      %p49 = por %p47, %p48
      %p50 = scmp.ne.s32.totalorder %s42, %s45
      %p51 = scmp.eq.s32.totalorder %s18, 0
      %p52 = por %p50, %p51
      %p53 = scmp.ne.s32.totalorder %s42, %s45
      %p54 = scmp.eq.s32.totalorder %s23, 1
      %p55 = por %p53, %p54
      %p56 = scmp.ne.s32.totalorder %s45, %s46
      %p57 = scmp.eq.s32.totalorder %s23, 0
      %p58 = por %p56, %p57
      %p59 = scmp.ne.s32.totalorder %s45, %s46
      %p60 = scmp.eq.s32.totalorder %s24, 1
      %p61 = por %p59, %p60
      %p63 = scmp.ne.s32.totalorder %s46, %s62
      %p64 = scmp.eq.s32.totalorder %s24, 0
      %p65 = por %p63, %p64
      %s67 = sadd.s32 %s66, 1
      %p70 = scmp.eq.s32.totalorder %s18, 1
      %p71 = scmp.ne.s32.totalorder %s66, %s68
      %p72 = scmp.eq.s32.totalorder %s18, 0
      %p73 = por %p71, %p72
      %p74 = scmp.ne.s32.totalorder %s66, %s68
      %p75 = scmp.eq.s32.totalorder %s23, 1
      %p76 = por %p74, %p75
      %p77 = scmp.ne.s32.totalorder %s68, %s69
      %p78 = scmp.eq.s32.totalorder %s23, 0
      %p79 = por %p77, %p78
      %p80 = scmp.ne.s32.totalorder %s68, %s69
      %p81 = scmp.eq.s32.totalorder %s24, 1
      %p82 = por %p80, %p81
      %p84 = scmp.ne.s32.totalorder %s69, %s83
      %p85 = scmp.eq.s32.totalorder %s24, 0
      %p86 = por %p84, %p85
      %s88 = sadd.s32 %s87, 1
      %p91 = scmp.eq.s32.totalorder %s18, 1
      %p92 = scmp.ne.s32.totalorder %s87, %s89
      %p93 = scmp.eq.s32.totalorder %s18, 0
      %p94 = por %p92, %p93
      %p95 = scmp.ne.s32.totalorder %s87, %s89
      %p96 = scmp.eq.s32.totalorder %s23, 1
      %p97 = por %p95, %p96
      %p98 = scmp.ne.s32.totalorder %s89, %s90
      %p99 = scmp.eq.s32.totalorder %s23, 0
      %p100 = por %p98, %p99
      %p101 = scmp.ne.s32.totalorder %s89, %s90
      %p102 = scmp.eq.s32.totalorder %s24, 1
      %p103 = por %p101, %p102
      %p105 = scmp.ne.s32.totalorder %s90, %s104
      %p106 = scmp.eq.s32.totalorder %s24, 0
      %p107 = por %p105, %p106
      %s108 = ssub.s32 %s25, %s37
      %s109 = ssub.s32 %s26, %s33
      %s110 = sor.u32 %s108, %s109
      %p111 = scmp.eq.s32.totalorder %s110, 0
      %s113 = sadd.s32 %s112, 1
      %s114 = scalar_select %p111, %s112, %s113
      %p117 = pneg %p111
      %p118 = scmp.eq.s32.totalorder %s18, 1
      %p119 = por %p117, %p118
      %p120 = scmp.ne.s32.totalorder %s112, %s115
      %p121 = scmp.eq.s32.totalorder %s18, 0
      %p122 = por %p120, %p121
      %p123 = scmp.ne.s32.totalorder %s112, %s115
      %p124 = scmp.eq.s32.totalorder %s23, 1
      %p125 = por %p123, %p124
      %p126 = scmp.ne.s32.totalorder %s115, %s116
      %p127 = scmp.eq.s32.totalorder %s23, 0
      %p128 = por %p126, %p127
      %p129 = scmp.ne.s32.totalorder %s115, %s116
      %p130 = scmp.eq.s32.totalorder %s24, 1
      %p131 = por %p129, %p130
      %p133 = scmp.ne.s32.totalorder %s116, %s132
      %p134 = scmp.eq.s32.totalorder %s24, 0
      %p135 = por %p133, %p134
      %s136 = ssub.s32 %s25, %s37
      %s137 = ssub.s32 %s26, %s33
      %s138 = sor.u32 %s136, %s137
      %p139 = scmp.eq.s32.totalorder %s138, 0
      %s141 = sadd.s32 %s140, 1
      %s142 = scalar_select %p139, %s140, %s141
      %p145 = pneg %p139
      %p146 = scmp.eq.s32.totalorder %s18, 1
      %p147 = por %p145, %p146
      %p148 = scmp.ne.s32.totalorder %s140, %s143
      %p149 = scmp.eq.s32.totalorder %s18, 0
      %p150 = por %p148, %p149
      %p151 = scmp.ne.s32.totalorder %s140, %s143
      %p152 = scmp.eq.s32.totalorder %s23, 1
      %p153 = por %p151, %p152
      %p154 = scmp.ne.s32.totalorder %s143, %s144
      %p155 = scmp.eq.s32.totalorder %s23, 0
      %p156 = por %p154, %p155
      %p157 = scmp.ne.s32.totalorder %s143, %s144
      %p158 = scmp.eq.s32.totalorder %s24, 1
      %p159 = por %p157, %p158
      %p161 = scmp.ne.s32.totalorder %s144, %s160
      %p162 = scmp.eq.s32.totalorder %s24, 0
      %p163 = por %p161, %p162
      %s164 = ssub.s32 %s25, %s37
      %s165 = ssub.s32 %s26, %s33
      %s166 = sor.u32 %s164, %s165
      %p167 = scmp.eq.s32.totalorder %s166, 0
      %s169 = sadd.s32 %s168, 1
      %s170 = scalar_select %p167, %s168, %s169
      %p173 = pneg %p167
      %p174 = scmp.eq.s32.totalorder %s18, 1
      %p175 = por %p173, %p174
      %p176 = scmp.ne.s32.totalorder %s168, %s171
      %p177 = scmp.eq.s32.totalorder %s18, 0
      %p178 = por %p176, %p177
      %p179 = scmp.ne.s32.totalorder %s168, %s171
      %p180 = scmp.eq.s32.totalorder %s23, 1
      %p181 = por %p179, %p180
      %p182 = scmp.ne.s32.totalorder %s171, %s172
      %p183 = scmp.eq.s32.totalorder %s23, 0
      %p184 = por %p182, %p183
      %p185 = scmp.ne.s32.totalorder %s171, %s172
      %p186 = scmp.eq.s32.totalorder %s24, 1
      %p187 = por %p185, %p186
      %p189 = scmp.ne.s32.totalorder %s172, %s188
      %p190 = scmp.eq.s32.totalorder %s24, 0
      %p191 = por %p189, %p190
      %p192 = scmp.le.s32.totalorder 1, %s18
      %p193 = scmp.lt.s32.totalorder %s18, 3
      %p194 = pnand %p192, %p193
      %p195 = pneg %p194
      // Predicated region
      $region9: #{tpu_custom_call.1} parent=5 // pred_check
        _
      $region10: #{tpu_custom_call.1} parent=5 // pred_check_branch
        %197 = sbr.rel (%p194) target = $region12
      $region11: #{tpu_custom_call.1} parent=5 // pred_region
        %s198 = ssub.s32 %s18, 1
        // Predicated region
        $region13: #{tpu_custom_call.1} parent=11 // pred_check
          %p199 = pneg %p79
        $region14: #{tpu_custom_call.1} parent=11 // pred_check_branch
          %201 = sbr.rel (%p199) target = $region16
        $region15: #{tpu_custom_call.1} parent=11 // pred_region
          _
        $region16: #{tpu_custom_call.1} parent=11 // pred_fallthru
          _
        // Predicated region
        $region17: #{tpu_custom_call.1} parent=11 // pred_check
          %p202 = pneg %p100
        $region18: #{tpu_custom_call.1} parent=11 // pred_check_branch
          %204 = sbr.rel (%p202) target = $region20
        $region19: #{tpu_custom_call.1} parent=11 // pred_region
          _
        $region20: #{tpu_custom_call.1} parent=11 // pred_fallthru
          _
      $region12: #{tpu_custom_call.1} parent=5 // pred_fallthru
        _
      %p205 = scmp.lt.s32.totalorder %s18, 2
      // Predicated region
      $region21: #{tpu_custom_call.1} parent=5 // pred_check
        %p206 = pneg %p205
      $region22: #{tpu_custom_call.1} parent=5 // pred_check_branch
        %208 = sbr.rel (%p206) target = $region24
      $region23: #{tpu_custom_call.1} parent=5 // pred_region
        // Predicated region
        $region25: #{tpu_custom_call.1} parent=23 // pred_check
          %p209 = pneg %p52
        $region26: #{tpu_custom_call.1} parent=23 // pred_check_branch
          %211 = sbr.rel (%p209) target = $region28
        $region27: #{tpu_custom_call.1} parent=23 // pred_region
          %s212 = sand.u32 %s42, 1
          %s213 = scalar_lea.sflag [#allocation3], %s212
          %s214 = sand.u32 %s42, 1
          %s215 = smul.addr %s214, 32
          %s216 = scalar_lea.vmem [#allocation2], %s215
          %s217 = smul.u32 2, %s26
          %s219 = ssub.s32 512, 512
          %220 = vsyncadd %s213, %s219
          %s221 = smul.addr %s25, 4
          %s222 = sadd.s32 %s217, %s221
          %s223 = smul.addr %s222, 128
          %s224 = scalar_lea.hbm %s0, %s223
          %s225 = sshll.u32 %s216, 4
          %s226 = int_to_ptr.vmem [resolvable:$true] %s225
          %231 = dma.hbm_to_vmem [thread:$0]  %s224, 512, %s226, %s213, 256, 256, 16
        $region28: #{tpu_custom_call.1} parent=23 // pred_fallthru
          _
      $region24: #{tpu_custom_call.1} parent=5 // pred_fallthru
        _
      %p232 = scmp.le.s32.totalorder 1, %s18
      %p233 = scmp.lt.s32.totalorder %s18, 3
      %p234 = pnand %p232, %p233
      %p235 = pneg %p234
      // Predicated region
      $region29: #{tpu_custom_call.1} parent=5 // pred_check
        _
      $region30: #{tpu_custom_call.1} parent=5 // pred_check_branch
        %237 = sbr.rel (%p234) target = $region32
      $region31: #{tpu_custom_call.1} parent=5 // pred_region
        %s238 = ssub.s32 %s18, 1
        %s239 = sand.u32 %s45, 1
        %s240 = scalar_lea.sflag [#allocation3], %s239
        %s241 = sand.u32 %s45, 1
        %s242 = smul.addr %s241, 32
        %s243 = scalar_lea.vmem [#allocation2], %s242
        // Predicated region
        $region33: #{tpu_custom_call.1} parent=31 // pred_check
          %p244 = pneg %p58
        $region34: #{tpu_custom_call.1} parent=31 // pred_check_branch
          %246 = sbr.rel (%p244) target = $region36
        $region35: #{tpu_custom_call.1} parent=31 // pred_region
          %247 = dma.done %s240, 512
        $region36: #{tpu_custom_call.1} parent=31 // pred_fallthru
          _
        %s248 = sand.u32 %s45, 1
        %s249 = scalar_lea.sflag [#allocation3], %s248
        %s250 = sand.u32 %s45, 1
        %s251 = smul.addr %s250, 32
        %s252 = scalar_lea.vmem [#allocation2], %s251
        %p253 = pneg %p58
        %p254 = pneg %p55
        %p255 = pneg %p79
        %p256 = pneg %p76
        %p257 = pneg %p100
        %p258 = pneg %p97
        %p259 = pneg %p128
        %p260 = pneg %p125
        %s261 = sand.u32 %s115, 1
        %s262 = scalar_lea.sflag [#allocation4], %s261
        %s263 = sand.u32 %s115, 1
        %s264 = smul.addr %s263, 16
        %s265 = scalar_lea.vmem [#allocation5], %s264
        %p266 = pneg %p156
        %p267 = pneg %p153
        %p268 = scmp.lt.s32.totalorder %s27, 1
        %s269 = scalar_select %p268, %s27, 1
        %p270 = scmp.lt.s32.totalorder %s28, 0
        %s271 = scalar_select %p270, %s28, 0
        %s272 = smul.addr %s271, 2
        %s273 = smul.addr %s269, 2
        %s274 = sadd.s32 %s272, %s273
        %s275 = smul.addr %s274, 8
        %s276 = scalar_lea.vmem %s4, %s275
        %p277 = pneg %p184
        %p278 = pneg %p181
        %p279 = scmp.lt.s32.totalorder %s27, 1
        %s280 = scalar_select %p279, %s27, 1
        %p281 = scmp.lt.s32.totalorder %s28, 0
        %s282 = scalar_select %p281, %s28, 0
        %s283 = smul.addr %s282, 2
        %s284 = smul.addr %s280, 2
        %s285 = sadd.s32 %s283, %s284
        %s286 = smul.addr %s285, 8
        %s287 = scalar_lea.vmem %s5, %s286
        %s288 = smul.u32 2, %s28
        %s289 = smul.u32 2, %s28
        %p290 = scmp.lt.s32.totalorder %s27, 1
        %s291 = scalar_select %p290, %s27, 1
        %p292 = scmp.lt.s32.totalorder %s28, 0
        %s293 = scalar_select %p292, %s28, 0
        %s294 = smul.addr %s293, 2
        %s295 = smul.addr %s291, 2
        %s296 = sadd.s32 %s294, %s295
        %s297 = smul.addr %s296, 8
        %s298 = scalar_lea.vmem %s4, %s297
        %p299 = scmp.lt.s32.totalorder %s27, 1
        %s300 = scalar_select %p299, %s27, 1
        %p301 = scmp.lt.s32.totalorder %s28, 0
        %s302 = scalar_select %p301, %s28, 0
        %s303 = smul.addr %s302, 2
        %s304 = smul.addr %s300, 2
        %s305 = sadd.s32 %s303, %s304
        %s306 = smul.addr %s305, 8
        %s307 = scalar_lea.vmem %s5, %s306
        %v309 = vld [vmem:[%s1] sm:$0xf]
        %v310 = vld [vmem:[%s1 + $0x4] sm:$0xf]
        %v311 = vld [vmem:[%s243] sm:$0xff]
        %v312 = vld [vmem:[%s243 + $0x8] sm:$0xff]
        %v313 = vld [vmem:[%s243 + $0x10] sm:$0xff]
        %v314 = vld [vmem:[%s243 + $0x18] sm:$0xff]
        %v315 = vpack.c.bf16 %v313, %v311
        %v316 = vpack.c.bf16 %v314, %v312
        %v317 = vld [vmem:[%s2] sm:$0xff]
        %v318 = vld [vmem:[%s2 + $0x8] sm:$0xff]
        %320 = vset.pattern.permute.xlu0 0
        %321 = vperm.xlu0 %320, %v317
        %v322 = vpop.permute.xlu0 %321
        %325 = vset.pattern.permute.xlu0 0
        %326 = vperm.xlu0 %325, %v318
        %v327 = vpop.permute.xlu0 %326
        %v331 = vunpack.c.l.b16 %v309
        %v332 = vunpack.c.l.b16 %v310
        %v333 = vpack.c.b16 %v332, %v331
        %vm334 = vcmask 130048
        %v336 = vsel %vm334, %v333, 0
        %338 = vmatprep.subr.bf16.mxu0 %v316
        %339 = vmatpush1.bf16.msra.mxu0 %v315
        %340 = vmatprep.subr.bf16.mxu0 0
        %341 = vmatpush1.bf16.msra.mxu0 0
        %342 = vmatprep.subr.bf16.mxu0 0
        %343 = vmatpush1.bf16.msra.mxu0 0
        %344 = vmatprep.subr.bf16.mxu0 0
        %345 = vmatpush1.bf16.msra.mxu0 0
        %346 = vmatprep.subr.bf16.mxu0 0
        %347 = vmatpush1.bf16.msra.mxu0 0
        %348 = vmatprep.subr.bf16.mxu0 0
        %349 = vmatpush1.bf16.msra.mxu0 0
        %350 = vmatprep.subr.bf16.mxu0 0
        %351 = vmatpush1.bf16.msra.mxu0 0
        %352 = vmatprep.subr.bf16.mxu0 0
        %353 = vmatpush1.bf16.msra.mxu0 0
        %354 = vmatprep.subr.bf16.mxu0 0
        %355 = vmatpush1.bf16.msra.mxu0 0
        %356 = vmatprep.subr.bf16.mxu0 0
        %357 = vmatpush1.bf16.msra.mxu0 0
        %358 = vmatprep.subr.bf16.mxu0 0
        %359 = vmatpush1.bf16.msra.mxu0 0
        %360 = vmatprep.subr.bf16.mxu0 0
        %361 = vmatpush1.bf16.msra.mxu0 0
        %362 = vmatprep.subr.bf16.mxu0 0
        %363 = vmatpush1.bf16.msra.mxu0 0
        %364 = vmatprep.subr.bf16.mxu0 0
        %365 = vmatpush1.bf16.msra.mxu0 0
        %366 = vmatprep.subr.bf16.mxu0 0
        %367 = vmatpush1.bf16.msra.mxu0 0
        %368 = vmatprep.subr.bf16.mxu0 0
        %369 = vmatpush1.bf16.msra.mxu0 0
        %370 = vmatprep.mubr.bf16.mxu0 0
        %371 = vmatmul.mubr.bf16.gmra.mrb[0].mxu0 %v336
        %v372 = vpop.f32.mrb[0].mxu0
        %v373 = vadd.f32 %v322, %v372
        %v374 = vpop.f32.mrb[0].mxu0
        %v375 = vadd.f32 %v322, %v374
        %v376 = vpop.f32.mrb[0].mxu0
        %v377 = vadd.f32 %v327, %v376
        %v378 = vpop.f32.mrb[0].mxu0
        %v379 = vadd.f32 %v327, %v378
        %380 = vdwg.mxu0
        %v381 = vpack.c.bf16 %v377, %v373
        %v382 = vpack.c.bf16 %v379, %v375
        %v385 = vunpack.c.l.b16 %v381
        %v386 = vunpack.c.l.b16 %v382
        %v387 = vunpack.c.h.b16 %v381
        %v388 = vunpack.c.h.b16 %v382
        %v389 = vpack.c.b16 %v386, %v385
        %v390 = vpack.c.b16 %v388, %v387
        %393 = vst [vmem:[%s265] sm:$0xff] %v389
        %394 = vst [vmem:[%s265 + $0x8] sm:$0xff] %v390
        %v395 = vunpack.c.l.bf16 %v381
        %v396 = vunpack.c.l.bf16 %v382
        %v397 = vunpack.c.h.bf16 %v381
        %v398 = vunpack.c.h.bf16 %v382
        %v399 = vadd.f32 %v395, %v396
        %400 = vadd.xlane.f32.xlu0 %v399
        %v401 = vpop.xlane.xlu0 %400
        %v402 = vadd.f32 %v397, %v398
        %403 = vadd.xlane.f32.xlu0 %v402
        %v404 = vpop.xlane.xlu0 %403
        %v405 = vrcp.pop 256.0
        %v406 = vmul.f32 %v401, %v405
        %v407 = vmul.f32 %v404, %v405
        %v408 = vsub.f32 %v395, %v406
        %v409 = vsub.f32 %v396, %v406
        %v410 = vsub.f32 %v397, %v407
        %v411 = vsub.f32 %v398, %v407
        %vm412 = vcmask 7168
        %413 = vst.msk [vmem:[%s298] sm:$0xff] %vm412, %v401
        %414 = vst.msk [vmem:[%s298 + $0x8] sm:$0xff] %vm412, %v404
        %v415 = vmul.f32 %v408, %v408
        %v416 = vmul.f32 %v409, %v409
        %v417 = vmul.f32 %v410, %v410
        %v418 = vmul.f32 %v411, %v411
        %v419 = vadd.f32 %v415, %v416
        %420 = vadd.xlane.f32.xlu0 %v419
        %v421 = vpop.xlane.xlu0 %420
        %v422 = vadd.f32 %v417, %v418
        %423 = vadd.xlane.f32.xlu0 %v422
        %v424 = vpop.xlane.xlu0 %423
        %425 = vst.msk [vmem:[%s307] sm:$0xff] %vm412, %v421
        %426 = vst.msk [vmem:[%s307 + $0x8] sm:$0xff] %vm412, %v424
        %s427 = sand.u32 %s115, 1
        %s428 = scalar_lea.sflag [#allocation4], %s427
        %s429 = sand.u32 %s115, 1
        %s430 = smul.addr %s429, 16
        %s431 = scalar_lea.vmem [#allocation5], %s430
        %p432 = scmp.lt.s32.totalorder %s27, 1
        %s433 = scalar_select %p432, %s27, 1
        %p434 = scmp.lt.s32.totalorder %s28, 0
        %s435 = scalar_select %p434, %s28, 0
        %s436 = smul.addr %s435, 2
        %s437 = smul.addr %s433, 2
        %s438 = sadd.s32 %s436, %s437
        %s439 = smul.addr %s438, 8
        %s440 = scalar_lea.vmem %s4, %s439
        %p441 = scmp.lt.s32.totalorder %s27, 1
        %s442 = scalar_select %p441, %s27, 1
        %p443 = scmp.lt.s32.totalorder %s28, 0
        %s444 = scalar_select %p443, %s28, 0
        %s445 = smul.addr %s444, 2
        %s446 = smul.addr %s442, 2
        %s447 = sadd.s32 %s445, %s446
        %s448 = smul.addr %s447, 8
        %s449 = scalar_lea.vmem %s5, %s448
        // Predicated region
        $region37: #{tpu_custom_call.1} parent=31 // pred_check
          %p450 = pneg %p125
        $region38: #{tpu_custom_call.1} parent=31 // pred_check_branch
          %452 = sbr.rel (%p450) target = $region40
        $region39: #{tpu_custom_call.1} parent=31 // pred_region
          %s453 = smul.u32 2, %s28
          %s455 = ssub.s32 256, 256
          %456 = vsyncadd %s428, %s455
          %s457 = smul.addr %s27, 4
          %s458 = sadd.s32 %s453, %s457
          %s459 = smul.addr %s458, 64
          %s460 = scalar_lea.hbm %s3, %s459
          %s461 = sshll.u32 %s431, 4
          %s462 = int_to_ptr.vmem [resolvable:$true] %s461
          %467 = dma.vmem_to_hbm [thread:$0]  %s462, 256, %s460, %s428, 128, 128, 8
        $region40: #{tpu_custom_call.1} parent=31 // pred_fallthru
          _
        // Predicated region
        $region41: #{tpu_custom_call.1} parent=31 // pred_check
          %p468 = pneg %p153
        $region42: #{tpu_custom_call.1} parent=31 // pred_check_branch
          %470 = sbr.rel (%p468) target = $region44
        $region43: #{tpu_custom_call.1} parent=31 // pred_region
          _
        $region44: #{tpu_custom_call.1} parent=31 // pred_fallthru
          _
        // Predicated region
        $region45: #{tpu_custom_call.1} parent=31 // pred_check
          %p471 = pneg %p181
        $region46: #{tpu_custom_call.1} parent=31 // pred_check_branch
          %473 = sbr.rel (%p471) target = $region48
        $region47: #{tpu_custom_call.1} parent=31 // pred_region
          _
        $region48: #{tpu_custom_call.1} parent=31 // pred_fallthru
          _
      $region32: #{tpu_custom_call.1} parent=5 // pred_fallthru
        _
      %p474 = scmp.le.s32.totalorder 2, %s18
      // Predicated region
      $region49: #{tpu_custom_call.1} parent=5 // pred_check
        %p475 = pneg %p474
      $region50: #{tpu_custom_call.1} parent=5 // pred_check_branch
        %477 = sbr.rel (%p475) target = $region52
      $region51: #{tpu_custom_call.1} parent=5 // pred_region
        %s478 = ssub.s32 %s18, 2
        // Predicated region
        $region53: #{tpu_custom_call.1} parent=51 // pred_check
          %p479 = pneg %p131
        $region54: #{tpu_custom_call.1} parent=51 // pred_check_branch
          %481 = sbr.rel (%p479) target = $region56
        $region55: #{tpu_custom_call.1} parent=51 // pred_region
          %s482 = sand.u32 %s116, 1
          %s483 = scalar_lea.sflag [#allocation4], %s482
          %s484 = sand.u32 %s116, 1
          %s485 = smul.addr %s484, 16
          %s486 = scalar_lea.vmem [#allocation5], %s485
          %487 = dma.done %s483, 256
        $region56: #{tpu_custom_call.1} parent=51 // pred_fallthru
          _
        // Predicated region
        $region57: #{tpu_custom_call.1} parent=51 // pred_check
          %p488 = pneg %p159
        $region58: #{tpu_custom_call.1} parent=51 // pred_check_branch
          %490 = sbr.rel (%p488) target = $region60
        $region59: #{tpu_custom_call.1} parent=51 // pred_region
          %p491 = scmp.lt.s32.totalorder %s29, 1
          %s492 = scalar_select %p491, %s29, 1
          %p493 = scmp.lt.s32.totalorder %s30, 0
          %s494 = scalar_select %p493, %s30, 0
          %s495 = smul.addr %s494, 2
          %s496 = smul.addr %s492, 2
          %s497 = sadd.s32 %s495, %s496
          %s498 = smul.addr %s497, 8
          %s499 = scalar_lea.vmem %s4, %s498
        $region60: #{tpu_custom_call.1} parent=51 // pred_fallthru
          _
        // Predicated region
        $region61: #{tpu_custom_call.1} parent=51 // pred_check
          %p500 = pneg %p187
        $region62: #{tpu_custom_call.1} parent=51 // pred_check_branch
          %502 = sbr.rel (%p500) target = $region64
        $region63: #{tpu_custom_call.1} parent=51 // pred_region
          %p503 = scmp.lt.s32.totalorder %s29, 1
          %s504 = scalar_select %p503, %s29, 1
          %p505 = scmp.lt.s32.totalorder %s30, 0
          %s506 = scalar_select %p505, %s30, 0
          %s507 = smul.addr %s506, 2
          %s508 = smul.addr %s504, 2
          %s509 = sadd.s32 %s507, %s508
          %s510 = smul.addr %s509, 8
          %s511 = scalar_lea.vmem %s5, %s510
        $region64: #{tpu_custom_call.1} parent=51 // pred_fallthru
          _
      $region52: #{tpu_custom_call.1} parent=5 // pred_fallthru
        _
    $region6: #{tpu_custom_call.1} parent=1 // loop_footer
      %s22 = sadd.s32 1, %s18
    $region7: #{tpu_custom_call.1} parent=1 // loop_footer_branch
      %17 = sbr.rel target = $region3
    $region8: #{tpu_custom_call.1} parent=1 // loop_exit
      _
    %512 = vsyncpa [#allocation3], 1
    %s513 = scalar_lea.sflag [#allocation3], 1
    %514 = vsyncpa %s513, 1
    %515 = vsyncpa [#allocation4], 1
    %s516 = scalar_lea.sflag [#allocation4], 1
    %517 = vsyncpa %s516, 1

</llo_original>
